<compile_context>
chip_gen: v5e
topology: v5e:2x2
jax: 0.10.0
libtpu: 0.0.40
codegen_flags: <defaults>
</compile_context>

<pallas_src>
import jax
import jax.numpy as jnp
from jax import lax
from jax.experimental import pallas as pl
from jax.experimental.pallas import tpu as pltpu


def _row_normalize(x):
    """x / (row_sum + 1e-14) via EUP reciprocal + one Newton refinement."""
    s = jnp.sum(x, axis=-1, keepdims=True) + 1e-14
    inv = pl.reciprocal(s, approx=True)      # EUP slot (nearly free)
    inv = inv * (2.0 - s * inv)              # Newton step -> ~f32-exact
    return x * inv


def _cumsum_lanes_scan(d):
    """Inclusive prefix sum along the last (lane) axis: log2(N) roll+add."""
    n = d.shape[-1]
    lane_axis = d.ndim - 1                    # pltpu.roll needs a >= 0 axis
    col = lax.broadcasted_iota(jnp.int32, (1, n), 1)
    x = d
    shift = 1
    while shift < n:                          # unrolled at trace time
        mask = (col >= shift).astype(d.dtype)           # (1, N) 0/1 lane mask
        rolled = pltpu.roll(x, shift, axis=lane_axis)   # rolled[i] = x[i-shift]
        x = x + rolled * mask                 # mul+add per data vreg (VPU)
        shift *= 2
    return x


def _wasserstein_kernel_scan(a_ref, b_ref, dist_ref):
    a = a_ref[...].astype(jnp.float32)
    b = b_ref[...].astype(jnp.float32)
    d = _row_normalize(a) - _row_normalize(b)            # (Bt, N)
    cdf_d = _cumsum_lanes_scan(d)
    dist_ref[...] = jnp.sum(jnp.abs(cdf_d), axis=-1, keepdims=True)  # (Bt, 1)


def _wasserstein_kernel_mxu(tri_ref, a_ref, b_ref, dist_ref):
    a = a_ref[...].astype(jnp.float32)
    b = b_ref[...].astype(jnp.float32)
    d = _row_normalize(a) - _row_normalize(b)            # (Bt, N)
    # tri is a resident VMEM block (DMA'd once, same block every grid step).
    cdf_d = jnp.dot(d, tri_ref[...], preferred_element_type=jnp.float32)
    dist_ref[...] = jnp.sum(jnp.abs(cdf_d), axis=-1, keepdims=True)  # (Bt, 1)


def _round_up(x, m):
    return (x + m - 1) // m * m


def wasserstein_loss(tensor_a, tensor_b, *, block_b=512, use_mxu=None):
    assert tensor_a.shape == tensor_b.shape and tensor_a.ndim == 2
    B, N = tensor_a.shape

    # Pad the bin axis to a lane-aligned width. Zero columns contribute only
    # ~1e-14-scale error after normalization, and we never build odd-N tiles.
    Np = _round_up(max(N, 128), 128)
    if Np != N:
        pad = ((0, 0), (0, Np - N))
        tensor_a = jnp.pad(tensor_a, pad)
        tensor_b = jnp.pad(tensor_b, pad)

    # VMEM budget with headroom: v7x only has 64 MiB per TensorCore, v5e/v6e
    # have 128 MiB. Fall back to a conservative 48 MiB if the query fails.
    try:
        vmem_cap = int(pltpu.get_tpu_info().vmem_capacity_bytes)
        vmem_limit = min(int(vmem_cap * 0.75), 96 * 1024 * 1024)
    except Exception:
        vmem_limit = 48 * 1024 * 1024

    # Batch tile: largest multiple of 8 that fits the budget (double-buffered
    # inputs + scan temporaries ~ 12 live f32 rows), capped by block_b and by
    # ~B/2 so v7x's two TensorCores both get a grid step.
    live_f32_rows = 12
    bt_budget = max(8, (vmem_limit // (Np * 4 * live_f32_rows)) // 8 * 8)
    Bt = min(block_b, bt_budget, _round_up(B, 8))
    if B > 8:
        Bt = min(Bt, _round_up((B + 1) // 2, 8))
    num_tiles = pl.cdiv(B, Bt)
    Bp = num_tiles * Bt
    if Bp != B:
        # Zero rows normalize to 0 (no NaNs) and are sliced off before the mean.
        pad = ((0, Bp - B), (0, 0))
        tensor_a = jnp.pad(tensor_a, pad)
        tensor_b = jnp.pad(tensor_b, pad)

    # Cumsum strategy: the XLU roll+add scan is O(N log N) and keeps the kernel
    # HBM-bound on v5e/v6e.  The O(N^2) MXU triangular matmul only pays off for
    # MXU-sized batch tiles and small N (mostly a v7x win).
    if use_mxu is None:
        use_mxu = (Bt >= 128) and (Np <= 512)

    scan_steps = max(1, (Np - 1).bit_length())
    cost = pl.CostEstimate(
        flops=int(2 * Bp * Np * (Np if use_mxu else 2 * scan_steps)),
        transcendentals=int(2 * Bp),
        bytes_accessed=int(2 * Bp * Np * tensor_a.dtype.itemsize + Bp * 4),
    )

    ab_spec = pl.BlockSpec((Bt, Np), lambda i: (i, 0))
    out_spec = pl.BlockSpec((Bt, 1), lambda i: (i, 0))

    if use_mxu:
        rows = lax.broadcasted_iota(jnp.int32, (Np, Np), 0)
        cols = lax.broadcasted_iota(jnp.int32, (Np, Np), 1)
        tri = (rows <= cols).astype(jnp.float32)      # built once, resident
        in_specs = [pl.BlockSpec((Np, Np), lambda i: (0, 0)), ab_spec, ab_spec]
        operands = (tri, tensor_a, tensor_b)
        kernel = _wasserstein_kernel_mxu
    else:
        in_specs = [ab_spec, ab_spec]
        operands = (tensor_a, tensor_b)
        kernel = _wasserstein_kernel_scan

    dist = pl.pallas_call(
        kernel,
        out_shape=jax.ShapeDtypeStruct((Bp, 1), jnp.float32),
        grid_spec=pltpu.PrefetchScalarGridSpec(
            num_scalar_prefetch=0,
            grid=(num_tiles,),
            in_specs=in_specs,
            out_specs=out_spec,
        ),
        compiler_params=pltpu.CompilerParams(
            dimension_semantics=("parallel",),   # per-tile results independent
            vmem_limit_bytes=vmem_limit,
        ),
        cost_estimate=cost,
    )(*operands)

    # Tiny final reduction in the wrapper keeps the grid axis parallel.
    return jnp.sum(dist[:B, 0]) / B


def _reference(a, b):
    an = a / (jnp.sum(a, axis=-1, keepdims=True) + 1e-14)
    bn = b / (jnp.sum(b, axis=-1, keepdims=True) + 1e-14)
    return jnp.mean(jnp.sum(jnp.abs(jnp.cumsum(an, -1) - jnp.cumsum(bn, -1)), -1))


if __name__ == "__main__":
    key = jax.random.PRNGKey(0)
    ka, kb, kc, kd = jax.random.split(key, 4)

    # Main case: batch of 8 distributions, 128 bins each (scan path).
    B, N = 8, 128
    a = jax.random.uniform(ka, (B, N), dtype=jnp.float32)
    b = jax.random.uniform(kb, (B, N), dtype=jnp.float32)

    loss = wasserstein_loss(a, b)
    jax.block_until_ready(loss)
    ref = _reference(a, b)
    assert jnp.allclose(loss, ref, atol=1e-5, rtol=1e-4), (loss, ref)

    # Same inputs through the MXU (resident triangular matmul) path.
    loss_mxu = wasserstein_loss(a, b, use_mxu=True)
    jax.block_until_ready(loss_mxu)
    assert jnp.allclose(loss_mxu, ref, atol=1e-5, rtol=1e-4), (loss_mxu, ref)

    # Ragged shapes (batch and bins padded inside the wrapper).
    B2, N2 = 5, 100
    a2 = jax.random.uniform(kc, (B2, N2), dtype=jnp.float32)
    b2 = jax.random.uniform(kd, (B2, N2), dtype=jnp.float32)
    loss2 = wasserstein_loss(a2, b2)
    jax.block_until_ready(loss2)
    ref2 = _reference(a2, b2)
    assert jnp.allclose(loss2, ref2, atol=1e-5, rtol=1e-4), (loss2, ref2)

    print("KERNEL_OK")
</pallas_src>

<mosaic_0001>
module attributes {stable_mosaic.version = 11 : i64} {
  func.func @_wasserstein_kernel_scan(%arg0: i32, %arg1: memref<8x128xf32, #tpu.memory_space<vmem>>, %arg2: memref<8x128xf32, #tpu.memory_space<vmem>>, %arg3: memref<8x1xf32, #tpu.memory_space<vmem>>) attributes {dimension_semantics = [#tpu.dimension_semantics<parallel>], iteration_bounds = array<i64: 1>, scalar_prefetch = 0 : i64, scratch_operands = 0 : i64, tpu.core_type = #tpu.core_type<tc>, window_params = [{transform_indices = @transform_0, window_bounds = array<i64: 8, 128>}, {transform_indices = @transform_1, window_bounds = array<i64: 8, 128>}, {transform_indices = @transform_2, window_bounds = array<i64: 8, 1>}]} {
    %c0 = arith.constant 0 : index
    %c0_0 = arith.constant 0 : index
    %0 = vector.load %arg1[%c0, %c0_0] : memref<8x128xf32, #tpu.memory_space<vmem>>, vector<8x128xf32>
    %c0_1 = arith.constant 0 : index
    %c0_2 = arith.constant 0 : index
    %1 = vector.load %arg2[%c0_1, %c0_2] : memref<8x128xf32, #tpu.memory_space<vmem>>, vector<8x128xf32>
    %cst = arith.constant dense<0.000000e+00> : vector<8xf32>
    %2 = vector.multi_reduction <add>, %0, %cst [1] : vector<8x128xf32> to vector<8xf32>
    %3 = vector.shape_cast %2 : vector<8xf32> to vector<8x1xf32>
    %cst_3 = arith.constant 9.99999982E-15 : f32
    %4 = vector.broadcast %cst_3 : f32 to vector<8x1xf32>
    %5 = arith.addf %3, %4 : vector<8x1xf32>
    %6 = tpu.reciprocal %5 {approx = true} : vector<8x1xf32> -> vector<8x1xf32>
    %7 = arith.mulf %5, %6 : vector<8x1xf32>
    %cst_4 = arith.constant 2.000000e+00 : f32
    %8 = vector.broadcast %cst_4 : f32 to vector<8x1xf32>
    %9 = arith.subf %8, %7 : vector<8x1xf32>
    %10 = arith.mulf %6, %9 : vector<8x1xf32>
    %11 = vector.broadcast %10 : vector<8x1xf32> to vector<8x128xf32>
    %12 = arith.mulf %0, %11 : vector<8x128xf32>
    %cst_5 = arith.constant dense<0.000000e+00> : vector<8xf32>
    %13 = vector.multi_reduction <add>, %1, %cst_5 [1] : vector<8x128xf32> to vector<8xf32>
    %14 = vector.shape_cast %13 : vector<8xf32> to vector<8x1xf32>
    %cst_6 = arith.constant 9.99999982E-15 : f32
    %15 = vector.broadcast %cst_6 : f32 to vector<8x1xf32>
    %16 = arith.addf %14, %15 : vector<8x1xf32>
    %17 = tpu.reciprocal %16 {approx = true} : vector<8x1xf32> -> vector<8x1xf32>
    %18 = arith.mulf %16, %17 : vector<8x1xf32>
    %cst_7 = arith.constant 2.000000e+00 : f32
    %19 = vector.broadcast %cst_7 : f32 to vector<8x1xf32>
    %20 = arith.subf %19, %18 : vector<8x1xf32>
    %21 = arith.mulf %17, %20 : vector<8x1xf32>
    %22 = vector.broadcast %21 : vector<8x1xf32> to vector<8x128xf32>
    %23 = arith.mulf %1, %22 : vector<8x128xf32>
    %24 = arith.subf %12, %23 : vector<8x128xf32>
    %25 = tpu.iota {dimensions = array<i32: 1>} : vector<1x128xi32>
    %c1_i32 = arith.constant 1 : i32
    %26 = vector.broadcast %c1_i32 : i32 to vector<1x128xi32>
    %27 = arith.cmpi sge, %25, %26 : vector<1x128xi32>
    %28 = arith.extui %27 : vector<1x128xi1> to vector<1x128xi32>
    %29 = arith.sitofp %28 : vector<1x128xi32> to vector<1x128xf32>
    %c1_i32_8 = arith.constant 1 : i32
    %30 = tpu.dynamic_rotate %24 by %c1_i32_8 dim 1 : vector<8x128xf32>, i32 -> vector<8x128xf32>
    %31 = vector.broadcast %29 : vector<1x128xf32> to vector<8x128xf32>
    %32 = arith.mulf %30, %31 : vector<8x128xf32>
    %33 = arith.addf %24, %32 : vector<8x128xf32>
    %c2_i32 = arith.constant 2 : i32
    %34 = vector.broadcast %c2_i32 : i32 to vector<1x128xi32>
    %35 = arith.cmpi sge, %25, %34 : vector<1x128xi32>
    %36 = arith.extui %35 : vector<1x128xi1> to vector<1x128xi32>
    %37 = arith.sitofp %36 : vector<1x128xi32> to vector<1x128xf32>
    %c2_i32_9 = arith.constant 2 : i32
    %38 = tpu.dynamic_rotate %33 by %c2_i32_9 dim 1 : vector<8x128xf32>, i32 -> vector<8x128xf32>
    %39 = vector.broadcast %37 : vector<1x128xf32> to vector<8x128xf32>
    %40 = arith.mulf %38, %39 : vector<8x128xf32>
    %41 = arith.addf %33, %40 : vector<8x128xf32>
    %c4_i32 = arith.constant 4 : i32
    %42 = vector.broadcast %c4_i32 : i32 to vector<1x128xi32>
    %43 = arith.cmpi sge, %25, %42 : vector<1x128xi32>
    %44 = arith.extui %43 : vector<1x128xi1> to vector<1x128xi32>
    %45 = arith.sitofp %44 : vector<1x128xi32> to vector<1x128xf32>
    %c4_i32_10 = arith.constant 4 : i32
    %46 = tpu.dynamic_rotate %41 by %c4_i32_10 dim 1 : vector<8x128xf32>, i32 -> vector<8x128xf32>
    %47 = vector.broadcast %45 : vector<1x128xf32> to vector<8x128xf32>
    %48 = arith.mulf %46, %47 : vector<8x128xf32>
    %49 = arith.addf %41, %48 : vector<8x128xf32>
    %c8_i32 = arith.constant 8 : i32
    %50 = vector.broadcast %c8_i32 : i32 to vector<1x128xi32>
    %51 = arith.cmpi sge, %25, %50 : vector<1x128xi32>
    %52 = arith.extui %51 : vector<1x128xi1> to vector<1x128xi32>
    %53 = arith.sitofp %52 : vector<1x128xi32> to vector<1x128xf32>
    %c8_i32_11 = arith.constant 8 : i32
    %54 = tpu.dynamic_rotate %49 by %c8_i32_11 dim 1 : vector<8x128xf32>, i32 -> vector<8x128xf32>
    %55 = vector.broadcast %53 : vector<1x128xf32> to vector<8x128xf32>
    %56 = arith.mulf %54, %55 : vector<8x128xf32>
    %57 = arith.addf %49, %56 : vector<8x128xf32>
    %c16_i32 = arith.constant 16 : i32
    %58 = vector.broadcast %c16_i32 : i32 to vector<1x128xi32>
    %59 = arith.cmpi sge, %25, %58 : vector<1x128xi32>
    %60 = arith.extui %59 : vector<1x128xi1> to vector<1x128xi32>
    %61 = arith.sitofp %60 : vector<1x128xi32> to vector<1x128xf32>
    %c16_i32_12 = arith.constant 16 : i32
    %62 = tpu.dynamic_rotate %57 by %c16_i32_12 dim 1 : vector<8x128xf32>, i32 -> vector<8x128xf32>
    %63 = vector.broadcast %61 : vector<1x128xf32> to vector<8x128xf32>
    %64 = arith.mulf %62, %63 : vector<8x128xf32>
    %65 = arith.addf %57, %64 : vector<8x128xf32>
    %c32_i32 = arith.constant 32 : i32
    %66 = vector.broadcast %c32_i32 : i32 to vector<1x128xi32>
    %67 = arith.cmpi sge, %25, %66 : vector<1x128xi32>
    %68 = arith.extui %67 : vector<1x128xi1> to vector<1x128xi32>
    %69 = arith.sitofp %68 : vector<1x128xi32> to vector<1x128xf32>
    %c32_i32_13 = arith.constant 32 : i32
    %70 = tpu.dynamic_rotate %65 by %c32_i32_13 dim 1 : vector<8x128xf32>, i32 -> vector<8x128xf32>
    %71 = vector.broadcast %69 : vector<1x128xf32> to vector<8x128xf32>
    %72 = arith.mulf %70, %71 : vector<8x128xf32>
    %73 = arith.addf %65, %72 : vector<8x128xf32>
    %c64_i32 = arith.constant 64 : i32
    %74 = vector.broadcast %c64_i32 : i32 to vector<1x128xi32>
    %75 = arith.cmpi sge, %25, %74 : vector<1x128xi32>
    %76 = arith.extui %75 : vector<1x128xi1> to vector<1x128xi32>
    %77 = arith.sitofp %76 : vector<1x128xi32> to vector<1x128xf32>
    %c64_i32_14 = arith.constant 64 : i32
    %78 = tpu.dynamic_rotate %73 by %c64_i32_14 dim 1 : vector<8x128xf32>, i32 -> vector<8x128xf32>
    %79 = vector.broadcast %77 : vector<1x128xf32> to vector<8x128xf32>
    %80 = arith.mulf %78, %79 : vector<8x128xf32>
    %81 = arith.addf %73, %80 : vector<8x128xf32>
    %82 = math.absf %81 : vector<8x128xf32>
    %cst_15 = arith.constant dense<0.000000e+00> : vector<8xf32>
    %83 = vector.multi_reduction <add>, %82, %cst_15 [1] : vector<8x128xf32> to vector<8xf32>
    %84 = vector.shape_cast %83 : vector<8xf32> to vector<8x1xf32>
    %c0_16 = arith.constant 0 : index
    %c0_17 = arith.constant 0 : index
    %85 = vector.load %arg3[%c0_16, %c0_17] : memref<8x1xf32, #tpu.memory_space<vmem>>, vector<8x1xf32>
    tpu.vector_store %arg3[%c0_16, %c0_17], %84 {strides = array<i32>} : memref<8x1xf32, #tpu.memory_space<vmem>>, vector<8x1xf32>,
    return
  }
  func.func @transform_0(%arg0: i32) -> (i32, i32) {
    %c0_i32 = arith.constant 0 : i32
    %c0_i32_0 = arith.constant 0 : i32
    return %arg0, %c0_i32 : i32, i32
  }
  func.func @transform_1(%arg0: i32) -> (i32, i32) {
    %c0_i32 = arith.constant 0 : i32
    %c0_i32_0 = arith.constant 0 : i32
    return %arg0, %c0_i32 : i32, i32
  }
  func.func @transform_2(%arg0: i32) -> (i32, i32) {
    %c0_i32 = arith.constant 0 : i32
    %c0_i32_0 = arith.constant 0 : i32
    return %arg0, %c0_i32 : i32, i32
  }
}

</mosaic_0001>

<llo_original>
// kernel: tpu_custom_call.1
$region0: #{tpu_custom_call.1}
  #allocation0 [shape = 'u32[]', space=smem, size = 0x4, offset = 0x4, fixed_abs, tag = 'smem constant byte address 0x4 - core index']
  #allocation1 [shape = 'u32[72,128]{1,0:T(1,128)}', space=vmem, size = 0x9000, scoped, tag = 'internal scratch']
  %s0 = inlined_call_operand.hbm [shape: f32[8,128], index: 0, kind: input, shape index: {}]
  %s1 = inlined_call_operand.hbm [shape: f32[8,128], index: 1, kind: input, shape index: {}]
  %s2 = inlined_call_operand.vmem [shape: f32[8,1], index: 2, kind: output, shape index: {}]
  %s3 = sld [smem:[#allocation0]]
  $region26: #{tpu_custom_call.1} parent=0
    _
  %s5 = ssub.s32 1, %s3
  %s6 = scalar_select 0, %s5, %s3
  $region1: #{tpu_custom_call.1} parent=0
    #allocation2 [shape = 'u8[4096]{0}', space=vmem, size = 0x1000, scoped, tag = 'input window, operand 0, single buffered']
    #allocation3 [shape = 's32[1]{0}', space=sflag, size = 0x4, scoped, tag = 'scoped memory for tpu_custom_call.1']
    #allocation4 [shape = 'u8[4096]{0}', space=vmem, size = 0x1000, scoped, tag = 'input window, operand 1, single buffered']
    #allocation5 [shape = 's32[1]{0}', space=sflag, size = 0x4, scoped, tag = 'scoped memory for tpu_custom_call.1']
    %7 = vsyncpa [#allocation3], 0
    %8 = vsyncpa [#allocation5], 0
    // Predicated region
    $region2: #{tpu_custom_call.1} parent=1 // pred_check
      _
    $region3: #{tpu_custom_call.1} parent=1 // pred_check_branch
      %10 = sbr.rel (0) target = $region5
    $region4: #{tpu_custom_call.1} parent=1 // pred_region
      %12 = vsyncadd [#allocation3], 0
      %s14 = sshll.u32 %s0, 4
      %s15 = int_to_ptr.hbm [resolvable:$true] %s14
      %s16 = sshll.u32 [#allocation2], 4
      %s17 = int_to_ptr.vmem [resolvable:$true] %s16
      %19 = dma.hbm_to_vmem [thread:$0]  %s15, 128, %s17, [#allocation3]
    $region5: #{tpu_custom_call.1} parent=1 // pred_fallthru
      _
    // Predicated region
    $region6: #{tpu_custom_call.1} parent=1 // pred_check
      _
    $region7: #{tpu_custom_call.1} parent=1 // pred_check_branch
      %21 = sbr.rel (0) target = $region9
    $region8: #{tpu_custom_call.1} parent=1 // pred_region
      %23 = vsyncadd [#allocation5], 0
      %s25 = sshll.u32 %s1, 4
      %s26 = int_to_ptr.hbm [resolvable:$true] %s25
      %s27 = sshll.u32 [#allocation4], 4
      %s28 = int_to_ptr.vmem [resolvable:$true] %s27
      %30 = dma.hbm_to_vmem [thread:$0]  %s26, 128, %s28, [#allocation5]
    $region9: #{tpu_custom_call.1} parent=1 // pred_fallthru
      _
    // Predicated region
    $region10: #{tpu_custom_call.1} parent=1 // pred_check
      _
    $region11: #{tpu_custom_call.1} parent=1 // pred_check_branch
      %32 = sbr.rel (0) target = $region13
    $region12: #{tpu_custom_call.1} parent=1 // pred_region
      %34 = dma.done [#allocation3], 128
    $region13: #{tpu_custom_call.1} parent=1 // pred_fallthru
      _
    // Predicated region
    $region14: #{tpu_custom_call.1} parent=1 // pred_check
      _
    $region15: #{tpu_custom_call.1} parent=1 // pred_check_branch
      %36 = sbr.rel (0) target = $region17
    $region16: #{tpu_custom_call.1} parent=1 // pred_region
      %38 = dma.done [#allocation5], 128
    $region17: #{tpu_custom_call.1} parent=1 // pred_fallthru
      _
    %v39 = vld [vmem:[#allocation2] sm:$0xff]
    %v40 = vld [vmem:[#allocation4] sm:$0xff]
    %41 = vadd.xlane.f32.xlu0 %v39
    %v42 = vpop.xlane.xlu0 %41
    %v43 = vadd.f32 %v42, 1e-14
    %v44 = vrcp.pop %v43
    %v45 = vmul.f32 %v43, %v44
    %v46 = vsub.f32 2.0, %v45
    %v47 = vmul.f32 %v44, %v46
    %v48 = vmul.f32 %v39, %v47
    %49 = vadd.xlane.f32.xlu0 %v40
    %v50 = vpop.xlane.xlu0 %49
    %v51 = vadd.f32 %v50, 1e-14
    %v52 = vrcp.pop %v51
    %v53 = vmul.f32 %v51, %v52
    %v54 = vsub.f32 2.0, %v53
    %v55 = vmul.f32 %v52, %v54
    %v56 = vmul.f32 %v40, %v55
    %v57 = vsub.f32 %v48, %v56
    %v58 = vlaneseq
    %v59 = vand.u32 %v58, 127
    %vm60 = vcmp.ge.s32.totalorder %v59, 1
    %v61 = vsel %vm60, 1, 0
    %v62 = vcvt.s32.f32 %v61
    %63 = vrot.lane.b32.xlu0 %v57, 1
    %v64 = vpop.permute.xlu0 %63
    %v65 = vmul.f32 %v64, %v62
    %v66 = vadd.f32 %v57, %v65
    %vm67 = vcmp.ge.s32.totalorder %v59, 2
    %v68 = vsel %vm67, 1, 0
    %v69 = vcvt.s32.f32 %v68
    %70 = vrot.lane.b32.xlu0 %v66, 2
    %v71 = vpop.permute.xlu0 %70
    %v72 = vmul.f32 %v71, %v69
    %v73 = vadd.f32 %v66, %v72
    %vm74 = vcmp.ge.s32.totalorder %v59, 4
    %v75 = vsel %vm74, 1, 0
    %v76 = vcvt.s32.f32 %v75
    %77 = vrot.lane.b32.xlu0 %v73, 4
    %v78 = vpop.permute.xlu0 %77
    %v79 = vmul.f32 %v78, %v76
    %v80 = vadd.f32 %v73, %v79
    %vm81 = vcmp.ge.s32.totalorder %v59, 8
    %v82 = vsel %vm81, 1, 0
    %v83 = vcvt.s32.f32 %v82
    %84 = vrot.lane.b32.xlu0 %v80, 8
    %v85 = vpop.permute.xlu0 %84
    %v86 = vmul.f32 %v85, %v83
    %v87 = vadd.f32 %v80, %v86
    %vm88 = vcmp.ge.s32.totalorder %v59, 16
    %v89 = vsel %vm88, 1, 0
    %v90 = vcvt.s32.f32 %v89
    %91 = vrot.lane.b32.xlu0 %v87, 16
    %v92 = vpop.permute.xlu0 %91
    %v93 = vmul.f32 %v92, %v90
    %v94 = vadd.f32 %v87, %v93
    %vm95 = vcmp.ge.s32.totalorder %v59, 32
    %v96 = vsel %vm95, 1, 0
    %v97 = vcvt.s32.f32 %v96
    %98 = vrot.lane.b32.xlu0 %v94, 32
    %v99 = vpop.permute.xlu0 %98
    %v100 = vmul.f32 %v99, %v97
    %v101 = vadd.f32 %v94, %v100
    %vm102 = vcmp.ge.s32.totalorder %v59, 64
    %v103 = vsel %vm102, 1, 0
    %v104 = vcvt.s32.f32 %v103
    %105 = vrot.lane.b32.xlu0 %v101, 64
    %v106 = vpop.permute.xlu0 %105
    %v107 = vmul.f32 %v106, %v104
    %v108 = vadd.f32 %v101, %v107
    %v109 = vand.u32 2147483647, %v108
    %110 = vadd.xlane.f32.xlu0 %v109
    %v111 = vpop.xlane.xlu0 %110
    %vm112 = vcmask 7168
    %113 = vst.msk [vmem:[%s2] sm:$0xff] %vm112, %v111
    // Predicated region
    $region18: #{tpu_custom_call.1} parent=1 // pred_check
      _
    $region19: #{tpu_custom_call.1} parent=1 // pred_check_branch
      %115 = sbr.rel (0) target = $region21
    $region20: #{tpu_custom_call.1} parent=1 // pred_region
      _
    $region21: #{tpu_custom_call.1} parent=1 // pred_fallthru
      _
    // Predicated region
    $region22: #{tpu_custom_call.1} parent=1 // pred_check
      _
    $region23: #{tpu_custom_call.1} parent=1 // pred_check_branch
      %117 = sbr.rel (0) target = $region25
    $region24: #{tpu_custom_call.1} parent=1 // pred_region
      _
    $region25: #{tpu_custom_call.1} parent=1 // pred_fallthru
      _
    %118 = vsyncpa [#allocation3], 1
    %119 = vsyncpa [#allocation5], 1

</llo_original>
